<compile_context>
chip_gen: v5e
topology: v5e:2x2
jax: 0.10.0
libtpu: 0.0.40
codegen_flags: <defaults>
</compile_context>

<pallas_src>
import jax
import jax.numpy as jnp
from jax.experimental import pallas as pl
from jax.experimental.pallas import tpu as pltpu


def _round_up(n: int, m: int) -> int:
    return ((n + m - 1) // m) * m


def actor_kernel(x_ref, w1_ref, b1_ref, w2_ref, b2_ref, w3_ref, b3_ref,
                 scale_ref, bias_ref, out_ref):
    # x arrives f32 from HBM; cast to bf16 on the VPU for full-rate MXU.
    x = x_ref[...].astype(jnp.bfloat16)
    # fc1 + relu  (bf16 x bf16 -> f32 accumulate on the MXU)
    h1 = jnp.dot(x, w1_ref[...], preferred_element_type=jnp.float32)
    h1 = jnp.maximum(h1 + b1_ref[...], 0.0)
    # fc2 + relu
    h2 = jnp.dot(h1.astype(jnp.bfloat16), w2_ref[...],
                 preferred_element_type=jnp.float32)
    h2 = jnp.maximum(h2 + b2_ref[...], 0.0)
    # fc_mu + tanh
    mu = jnp.dot(h2.astype(jnp.bfloat16), w3_ref[...],
                 preferred_element_type=jnp.float32)
    mu = jnp.tanh(mu + b3_ref[...])
    # rescale to action range (f32 epilogue)
    out_ref[...] = mu * scale_ref[...] + bias_ref[...]


# Max rows per batch tile for large batches (feedback: 512-1024; 512 keeps the
# working set ~2 MiB, comfortably inside every generation's scoped VMEM).
_TM_MAX = 512


def actor_forward(x, kparams):
    """x: [B, obs_dim] float32. kparams: output of prepare_params()."""
    w1, b1 = kparams["w1"], kparams["b1"]
    w2, b2 = kparams["w2"], kparams["b2"]
    w3, b3 = kparams["w3"], kparams["b3"]
    a_scale, a_bias = kparams["action_scale"], kparams["action_bias"]

    B, obs_dim = x.shape
    hidden = w1.shape[1]
    act_dim = w3.shape[1]

    if B <= _TM_MAX:
        # One full-array block: block dims equal array dims -> always legal,
        # no padding, no post-slice.  grid=(1,) -> single step.
        TM, B_P = B, B
        xp = x
    else:
        TM = _TM_MAX
        B_P = _round_up(B, TM)
        xp = x if B_P == B else jnp.pad(x, ((0, B_P - B), (0, 0)))
    grid = (B_P // TM,)

    const = lambda i: (0, 0)  # weights/biases: same (VMEM-resident) block
    in_specs = [
        pl.BlockSpec((TM, obs_dim), lambda i: (i, 0)),   # x tile (unpadded lanes)
        pl.BlockSpec((obs_dim, hidden), const),          # w1 (bf16)
        pl.BlockSpec((1, hidden), const),                # b1
        pl.BlockSpec((hidden, hidden), const),           # w2 (bf16)
        pl.BlockSpec((1, hidden), const),                # b2
        pl.BlockSpec((hidden, act_dim), const),          # w3 (bf16)
        pl.BlockSpec((1, act_dim), const),               # b3
        pl.BlockSpec((1, act_dim), const),               # action_scale
        pl.BlockSpec((1, act_dim), const),               # action_bias
    ]
    out_specs = pl.BlockSpec((TM, act_dim), lambda i: (i, 0))

    flops = 2 * B_P * (obs_dim * hidden + hidden * hidden + hidden * act_dim)
    bytes_accessed = (
        B_P * obs_dim * 4                                  # x (f32)
        + (w1.size + w2.size + w3.size) * 2                # bf16 weights
        + (b1.size + b2.size + b3.size + a_scale.size + a_bias.size) * 4
        + B_P * act_dim * 4)                               # output (f32)
    cost = pl.CostEstimate(flops=flops,
                           transcendentals=B_P * act_dim,
                           bytes_accessed=bytes_accessed)

    out = pl.pallas_call(
        actor_kernel,
        out_shape=jax.ShapeDtypeStruct((B_P, act_dim), jnp.float32),
        grid=grid,
        in_specs=in_specs,
        out_specs=out_specs,
        compiler_params=pltpu.CompilerParams(
            dimension_semantics=("parallel",),
            vmem_limit_bytes=32 * 1024 * 1024),
        cost_estimate=cost,
    )(xp, w1, b1, w2, b2, w3, b3, a_scale, a_bias)

    return out if B_P == B else out[:B]


def prepare_params(params):
    """One-time (init / after each optimizer step) conversion of the f32
    parameters into the kernel's layout: bf16 weights, f32 biases/scales.
    Hoisted out of actor_forward so each forward is a single Pallas call."""
    bf16 = jnp.bfloat16
    return dict(
        w1=params["w1"].astype(bf16), b1=params["b1"],
        w2=params["w2"].astype(bf16), b2=params["b2"],
        w3=params["w3"].astype(bf16), b3=params["b3"],
        action_scale=params["action_scale"],
        action_bias=params["action_bias"])


def init_params(key, obs_dim, act_dim, hidden=256,
                action_high=1.0, action_low=-1.0):
    """Deterministic synthetic init (PyTorch-Linear-style uniform fan-in)."""
    ks = jax.random.split(key, 6)

    def linear(kw, kb, fan_in, fan_out):
        bound = 1.0 / jnp.sqrt(fan_in)
        w = jax.random.uniform(kw, (fan_in, fan_out), jnp.float32, -bound, bound)
        b = jax.random.uniform(kb, (1, fan_out), jnp.float32, -bound, bound)
        return w, b

    w1, b1 = linear(ks[0], ks[1], obs_dim, hidden)
    w2, b2 = linear(ks[2], ks[3], hidden, hidden)
    w3, b3 = linear(ks[4], ks[5], hidden, act_dim)
    action_scale = jnp.full((1, act_dim), (action_high - action_low) / 2.0, jnp.float32)
    action_bias = jnp.full((1, act_dim), (action_high + action_low) / 2.0, jnp.float32)
    return dict(w1=w1, b1=b1, w2=w2, b2=b2, w3=w3, b3=b3,
                action_scale=action_scale, action_bias=action_bias)


if __name__ == "__main__":
    key = jax.random.PRNGKey(0)
    obs_dim, act_dim, batch = 8, 4, 2

    k_params, k_x = jax.random.split(key)
    params = init_params(k_params, obs_dim, act_dim,
                         action_high=2.0, action_low=-2.0)
    kparams = prepare_params(params)  # hoisted: done once, not per forward
    x = jax.random.normal(k_x, (batch, obs_dim), jnp.float32)

    out = actor_forward(x, kparams)
    out = jax.block_until_ready(out)

    # Pure-JAX f32 reference (kernel uses bf16 matmul inputs, f32 accumulate).
    h = jnp.maximum(x @ params["w1"] + params["b1"], 0.0)
    h = jnp.maximum(h @ params["w2"] + params["b2"], 0.0)
    ref = (jnp.tanh(h @ params["w3"] + params["b3"]) * params["action_scale"]
           + params["action_bias"])

    assert out.shape == (batch, act_dim)
    assert jnp.allclose(out, ref, atol=5e-2, rtol=5e-2), (out, ref)

    print("KERNEL_OK")
</pallas_src>

<mosaic_0001>
module attributes {stable_mosaic.version = 11 : i64} {
  func.func @actor_kernel(%arg0: i32, %arg1: memref<2x8xf32, #tpu.memory_space<vmem>>, %arg2: memref<8x256xbf16, #tpu.memory_space<vmem>>, %arg3: memref<1x256xf32, #tpu.memory_space<vmem>>, %arg4: memref<256x256xbf16, #tpu.memory_space<vmem>>, %arg5: memref<1x256xf32, #tpu.memory_space<vmem>>, %arg6: memref<256x4xbf16, #tpu.memory_space<vmem>>, %arg7: memref<1x4xf32, #tpu.memory_space<vmem>>, %arg8: memref<1x4xf32, #tpu.memory_space<vmem>>, %arg9: memref<1x4xf32, #tpu.memory_space<vmem>>, %arg10: memref<2x4xf32, #tpu.memory_space<vmem>>) attributes {dimension_semantics = [#tpu.dimension_semantics<parallel>], iteration_bounds = array<i64: 1>, scalar_prefetch = 0 : i64, scratch_operands = 0 : i64, tpu.core_type = #tpu.core_type<tc>, window_params = [{transform_indices = @transform_0, window_bounds = array<i64: 2, 8>}, {pipeline_mode = #tpu.pipeline_mode<synchronous>, transform_indices = @transform_1, window_bounds = array<i64: 8, 256>}, {pipeline_mode = #tpu.pipeline_mode<synchronous>, transform_indices = @transform_2, window_bounds = array<i64: 1, 256>}, {pipeline_mode = #tpu.pipeline_mode<synchronous>, transform_indices = @transform_3, window_bounds = array<i64: 256, 256>}, {pipeline_mode = #tpu.pipeline_mode<synchronous>, transform_indices = @transform_4, window_bounds = array<i64: 1, 256>}, {pipeline_mode = #tpu.pipeline_mode<synchronous>, transform_indices = @transform_5, window_bounds = array<i64: 256, 4>}, {pipeline_mode = #tpu.pipeline_mode<synchronous>, transform_indices = @transform_6, window_bounds = array<i64: 1, 4>}, {pipeline_mode = #tpu.pipeline_mode<synchronous>, transform_indices = @transform_7, window_bounds = array<i64: 1, 4>}, {pipeline_mode = #tpu.pipeline_mode<synchronous>, transform_indices = @transform_8, window_bounds = array<i64: 1, 4>}, {transform_indices = @transform_9, window_bounds = array<i64: 2, 4>}]} {
    %c0 = arith.constant 0 : index
    %c0_0 = arith.constant 0 : index
    %0 = vector.load %arg1[%c0, %c0_0] : memref<2x8xf32, #tpu.memory_space<vmem>>, vector<2x8xf32>
    %1 = arith.truncf %0 : vector<2x8xf32> to vector<2x8xbf16>
    %c0_1 = arith.constant 0 : index
    %c0_2 = arith.constant 0 : index
    %2 = vector.load %arg2[%c0_1, %c0_2] : memref<8x256xbf16, #tpu.memory_space<vmem>>, vector<8x256xbf16>
    %cst = arith.constant dense<0.000000e+00> : vector<2x256xf32>
    %3 = tpu.matmul %1, %2, %cst {dimension_numbers = #tpu.dot_dimension_numbers<[1], [0], [0], [1], [0, 0, 1, 1], [], []>} : vector<2x8xbf16>, vector<8x256xbf16>, vector<2x256xf32> -> vector<2x256xf32>
    %c0_3 = arith.constant 0 : index
    %c0_4 = arith.constant 0 : index
    %4 = vector.load %arg3[%c0_3, %c0_4] : memref<1x256xf32, #tpu.memory_space<vmem>>, vector<1x256xf32>
    %5 = vector.broadcast %4 : vector<1x256xf32> to vector<2x256xf32>
    %6 = arith.addf %3, %5 : vector<2x256xf32>
    %cst_5 = arith.constant 0.000000e+00 : f32
    %7 = vector.broadcast %cst_5 : f32 to vector<2x256xf32>
    %8 = arith.maximumf %6, %7 : vector<2x256xf32>
    %9 = arith.truncf %8 : vector<2x256xf32> to vector<2x256xbf16>
    %c0_6 = arith.constant 0 : index
    %c0_7 = arith.constant 0 : index
    %10 = vector.load %arg4[%c0_6, %c0_7] : memref<256x256xbf16, #tpu.memory_space<vmem>>, vector<256x256xbf16>
    %cst_8 = arith.constant dense<0.000000e+00> : vector<2x256xf32>
    %11 = tpu.matmul %9, %10, %cst_8 {dimension_numbers = #tpu.dot_dimension_numbers<[1], [0], [0], [1], [0, 0, 1, 1], [], []>} : vector<2x256xbf16>, vector<256x256xbf16>, vector<2x256xf32> -> vector<2x256xf32>
    %c0_9 = arith.constant 0 : index
    %c0_10 = arith.constant 0 : index
    %12 = vector.load %arg5[%c0_9, %c0_10] : memref<1x256xf32, #tpu.memory_space<vmem>>, vector<1x256xf32>
    %13 = vector.broadcast %12 : vector<1x256xf32> to vector<2x256xf32>
    %14 = arith.addf %11, %13 : vector<2x256xf32>
    %cst_11 = arith.constant 0.000000e+00 : f32
    %15 = vector.broadcast %cst_11 : f32 to vector<2x256xf32>
    %16 = arith.maximumf %14, %15 : vector<2x256xf32>
    %17 = arith.truncf %16 : vector<2x256xf32> to vector<2x256xbf16>
    %c0_12 = arith.constant 0 : index
    %c0_13 = arith.constant 0 : index
    %18 = vector.load %arg6[%c0_12, %c0_13] : memref<256x4xbf16, #tpu.memory_space<vmem>>, vector<256x4xbf16>
    %cst_14 = arith.constant dense<0.000000e+00> : vector<2x4xf32>
    %19 = tpu.matmul %17, %18, %cst_14 {dimension_numbers = #tpu.dot_dimension_numbers<[1], [0], [0], [1], [0, 0, 1, 1], [], []>} : vector<2x256xbf16>, vector<256x4xbf16>, vector<2x4xf32> -> vector<2x4xf32>
    %c0_15 = arith.constant 0 : index
    %c0_16 = arith.constant 0 : index
    %20 = vector.load %arg7[%c0_15, %c0_16] : memref<1x4xf32, #tpu.memory_space<vmem>>, vector<1x4xf32>
    %21 = vector.broadcast %20 : vector<1x4xf32> to vector<2x4xf32>
    %22 = arith.addf %19, %21 : vector<2x4xf32>
    %23 = math.tanh %22 : vector<2x4xf32>
    %c0_17 = arith.constant 0 : index
    %c0_18 = arith.constant 0 : index
    %24 = vector.load %arg8[%c0_17, %c0_18] : memref<1x4xf32, #tpu.memory_space<vmem>>, vector<1x4xf32>
    %25 = vector.broadcast %24 : vector<1x4xf32> to vector<2x4xf32>
    %26 = arith.mulf %23, %25 : vector<2x4xf32>
    %c0_19 = arith.constant 0 : index
    %c0_20 = arith.constant 0 : index
    %27 = vector.load %arg9[%c0_19, %c0_20] : memref<1x4xf32, #tpu.memory_space<vmem>>, vector<1x4xf32>
    %28 = vector.broadcast %27 : vector<1x4xf32> to vector<2x4xf32>
    %29 = arith.addf %26, %28 : vector<2x4xf32>
    %c0_21 = arith.constant 0 : index
    %c0_22 = arith.constant 0 : index
    %30 = vector.load %arg10[%c0_21, %c0_22] : memref<2x4xf32, #tpu.memory_space<vmem>>, vector<2x4xf32>
    tpu.vector_store %arg10[%c0_21, %c0_22], %29 {strides = array<i32>} : memref<2x4xf32, #tpu.memory_space<vmem>>, vector<2x4xf32>,
    return
  }
  func.func @transform_0(%arg0: i32) -> (i32, i32) {
    %c0_i32 = arith.constant 0 : i32
    %c0_i32_0 = arith.constant 0 : i32
    return %arg0, %c0_i32 : i32, i32
  }
  func.func @transform_1(%arg0: i32) -> (i32, i32) {
    %c0_i32 = arith.constant 0 : i32
    %c0_i32_0 = arith.constant 0 : i32
    %c0_i32_1 = arith.constant 0 : i32
    return %c0_i32, %c0_i32_0 : i32, i32
  }
  func.func @transform_2(%arg0: i32) -> (i32, i32) {
    %c0_i32 = arith.constant 0 : i32
    %c0_i32_0 = arith.constant 0 : i32
    %c0_i32_1 = arith.constant 0 : i32
    return %c0_i32, %c0_i32_0 : i32, i32
  }
  func.func @transform_3(%arg0: i32) -> (i32, i32) {
    %c0_i32 = arith.constant 0 : i32
    %c0_i32_0 = arith.constant 0 : i32
    %c0_i32_1 = arith.constant 0 : i32
    return %c0_i32, %c0_i32_0 : i32, i32
  }
  func.func @transform_4(%arg0: i32) -> (i32, i32) {
    %c0_i32 = arith.constant 0 : i32
    %c0_i32_0 = arith.constant 0 : i32
    %c0_i32_1 = arith.constant 0 : i32
    return %c0_i32, %c0_i32_0 : i32, i32
  }
  func.func @transform_5(%arg0: i32) -> (i32, i32) {
    %c0_i32 = arith.constant 0 : i32
    %c0_i32_0 = arith.constant 0 : i32
    %c0_i32_1 = arith.constant 0 : i32
    return %c0_i32, %c0_i32_0 : i32, i32
  }
  func.func @transform_6(%arg0: i32) -> (i32, i32) {
    %c0_i32 = arith.constant 0 : i32
    %c0_i32_0 = arith.constant 0 : i32
    %c0_i32_1 = arith.constant 0 : i32
    return %c0_i32, %c0_i32_0 : i32, i32
  }
  func.func @transform_7(%arg0: i32) -> (i32, i32) {
    %c0_i32 = arith.constant 0 : i32
    %c0_i32_0 = arith.constant 0 : i32
    %c0_i32_1 = arith.constant 0 : i32
    return %c0_i32, %c0_i32_0 : i32, i32
  }
  func.func @transform_8(%arg0: i32) -> (i32, i32) {
    %c0_i32 = arith.constant 0 : i32
    %c0_i32_0 = arith.constant 0 : i32
    %c0_i32_1 = arith.constant 0 : i32
    return %c0_i32, %c0_i32_0 : i32, i32
  }
  func.func @transform_9(%arg0: i32) -> (i32, i32) {
    %c0_i32 = arith.constant 0 : i32
    %c0_i32_0 = arith.constant 0 : i32
    return %arg0, %c0_i32 : i32, i32
  }
}

</mosaic_0001>

<llo_original>
// kernel: tpu_custom_call.1
$region0: #{tpu_custom_call.1}
  #allocation0 [shape = 'u32[]', space=smem, size = 0x4, offset = 0x4, fixed_abs, tag = 'smem constant byte address 0x4 - core index']
  #allocation1 [shape = 'u32[72,128]{1,0:T(1,128)}', space=vmem, size = 0x9000, scoped, tag = 'internal scratch']
  %s0 = inlined_call_operand.vmem [shape: f32[2,8], index: 0, kind: input, shape index: {}]
  %s1 = inlined_call_operand.vmem [shape: bf16[8,256], index: 1, kind: input, shape index: {}]
  %s2 = inlined_call_operand.vmem [shape: f32[1,256], index: 2, kind: input, shape index: {}]
  %s3 = inlined_call_operand.hbm [shape: bf16[256,256], index: 3, kind: input, shape index: {}]
  %s4 = inlined_call_operand.vmem [shape: f32[1,256], index: 4, kind: input, shape index: {}]
  %s5 = inlined_call_operand.vmem [shape: bf16[256,4], index: 5, kind: input, shape index: {}]
  %s6 = inlined_call_operand.vmem [shape: f32[1,4], index: 6, kind: input, shape index: {}]
  %s7 = inlined_call_operand.vmem [shape: f32[1,4], index: 7, kind: input, shape index: {}]
  %s8 = inlined_call_operand.vmem [shape: f32[1,4], index: 8, kind: input, shape index: {}]
  %s9 = inlined_call_operand.hbm [shape: f32[2,4], index: 9, kind: output, shape index: {}]
  %s10 = sld [smem:[#allocation0]]
  $region50: #{tpu_custom_call.1} parent=0
    _
  %s12 = ssub.s32 1, %s10
  %s13 = scalar_select 0, %s12, %s10
  $region1: #{tpu_custom_call.1} parent=0
    #allocation2 [shape = 'u8[131072]{0}', space=vmem, size = 0x20000, scoped, tag = 'input window, operand 3, single buffered']
    #allocation3 [shape = 's32[1]{0}', space=sflag, size = 0x4, scoped, tag = 'scoped memory for tpu_custom_call.1']
    #allocation4 [shape = 's32[1]{0}', space=sflag, size = 0x4, scoped, tag = 'scoped memory for tpu_custom_call.1']
    #allocation5 [shape = 'u8[1024]{0}', space=vmem, size = 0x400, scoped, tag = 'output window, operand 0, single buffered']
    %14 = vsyncpa [#allocation3], 0
    %15 = vsyncpa [#allocation4], 0
    // Predicated region
    $region2: #{tpu_custom_call.1} parent=1 // pred_check
      _
    $region3: #{tpu_custom_call.1} parent=1 // pred_check_branch
      %17 = sbr.rel (0) target = $region5
    $region4: #{tpu_custom_call.1} parent=1 // pred_region
      _
    $region5: #{tpu_custom_call.1} parent=1 // pred_fallthru
      _
    // Predicated region
    $region6: #{tpu_custom_call.1} parent=1 // pred_check
      _
    $region7: #{tpu_custom_call.1} parent=1 // pred_check_branch
      %19 = sbr.rel (0) target = $region9
    $region8: #{tpu_custom_call.1} parent=1 // pred_region
      _
    $region9: #{tpu_custom_call.1} parent=1 // pred_fallthru
      _
    // Predicated region
    $region10: #{tpu_custom_call.1} parent=1 // pred_check
      _
    $region11: #{tpu_custom_call.1} parent=1 // pred_check_branch
      %21 = sbr.rel (0) target = $region13
    $region12: #{tpu_custom_call.1} parent=1 // pred_region
      _
    $region13: #{tpu_custom_call.1} parent=1 // pred_fallthru
      _
    // Predicated region
    $region14: #{tpu_custom_call.1} parent=1 // pred_check
      _
    $region15: #{tpu_custom_call.1} parent=1 // pred_check_branch
      %23 = sbr.rel (0) target = $region17
    $region16: #{tpu_custom_call.1} parent=1 // pred_region
      %25 = vsyncadd [#allocation3], 0
      %s26 = sshll.u32 %s3, 4
      %s27 = int_to_ptr.hbm [resolvable:$true] %s26
      %s28 = sshll.u32 [#allocation2], 4
      %s29 = int_to_ptr.vmem [resolvable:$true] %s28
      %34 = dma.hbm_to_vmem [thread:$0]  %s27, 4096, %s29, [#allocation3], 128, 128, 8
    $region17: #{tpu_custom_call.1} parent=1 // pred_fallthru
      _
    // Predicated region
    $region18: #{tpu_custom_call.1} parent=1 // pred_check
      _
    $region19: #{tpu_custom_call.1} parent=1 // pred_check_branch
      %36 = sbr.rel (0) target = $region21
    $region20: #{tpu_custom_call.1} parent=1 // pred_region
      _
    $region21: #{tpu_custom_call.1} parent=1 // pred_fallthru
      _
    // Predicated region
    $region22: #{tpu_custom_call.1} parent=1 // pred_check
      _
    $region23: #{tpu_custom_call.1} parent=1 // pred_check_branch
      %38 = sbr.rel (0) target = $region25
    $region24: #{tpu_custom_call.1} parent=1 // pred_region
      _
    $region25: #{tpu_custom_call.1} parent=1 // pred_fallthru
      _
    // Predicated region
    $region26: #{tpu_custom_call.1} parent=1 // pred_check
      _
    $region27: #{tpu_custom_call.1} parent=1 // pred_check_branch
      %40 = sbr.rel (0) target = $region29
    $region28: #{tpu_custom_call.1} parent=1 // pred_region
      _
    $region29: #{tpu_custom_call.1} parent=1 // pred_fallthru
      _
    // Predicated region
    $region30: #{tpu_custom_call.1} parent=1 // pred_check
      _
    $region31: #{tpu_custom_call.1} parent=1 // pred_check_branch
      %42 = sbr.rel (0) target = $region33
    $region32: #{tpu_custom_call.1} parent=1 // pred_region
      _
    $region33: #{tpu_custom_call.1} parent=1 // pred_fallthru
      _
    // Predicated region
    $region34: #{tpu_custom_call.1} parent=1 // pred_check
      _
    $region35: #{tpu_custom_call.1} parent=1 // pred_check_branch
      %44 = sbr.rel (0) target = $region37
    $region36: #{tpu_custom_call.1} parent=1 // pred_region
      _
    $region37: #{tpu_custom_call.1} parent=1 // pred_fallthru
      _
    // Predicated region
    $region38: #{tpu_custom_call.1} parent=1 // pred_check
      _
    $region39: #{tpu_custom_call.1} parent=1 // pred_check_branch
      %46 = sbr.rel (0) target = $region41
    $region40: #{tpu_custom_call.1} parent=1 // pred_region
      %48 = dma.done [#allocation3], 4096
    $region41: #{tpu_custom_call.1} parent=1 // pred_fallthru
      _
    %v50 = vld [vmem:[%s0] sm:$0x3]
    %v51 = vpack.c.bf16 %v50, %v50
    %v52 = vld [vmem:[%s1] sm:$0xff]
    %v53 = vld [vmem:[%s2] sm:$0x3]
    %v55 = vperm.slane %v53, 0
    %v56 = vperm.slane %v53, 1
    %v60 = vunpack.c.l.b16 %v52
    %v61 = vunpack.c.h.b16 %v52
    %v62 = vpack.c.b16 %v60, %v60
    %v63 = vpack.c.b16 %v61, %v61
    %vm64 = vcmask 64512
    %v66 = vsel %vm64, %v51, 0
    %vm68 = vcmask 1043456
    %v70 = vsel %vm68, %v62, 0
    %v73 = vsel %vm68, %v63, 0
    %75 = vmatpush.bf16.msra.mxu0 0
    %76 = vmatpush.bf16.msra.mxu0 0
    %77 = vmatpush.bf16.msra.mxu0 0
    %78 = vmatpush.bf16.msra.mxu0 0
    %79 = vmatpush.bf16.msra.mxu0 0
    %80 = vmatpush.bf16.msra.mxu0 0
    %81 = vmatpush.bf16.msra.mxu0 0
    %82 = vmatpush.bf16.msra.mxu0 %v70
    %83 = vmatmul.bf16.gmra.mxu0 %v66
    %v84 = vpop.f32.mrf.mxu0
    %v85 = vadd.f32 %v55, %v84
    %v86 = vpop.f32.mrf.mxu0
    %87 = vdwg.mxu0
    %88 = vmatpush.bf16.msra.mxu0 0
    %89 = vmatpush.bf16.msra.mxu0 0
    %90 = vmatpush.bf16.msra.mxu0 0
    %91 = vmatpush.bf16.msra.mxu0 0
    %92 = vmatpush.bf16.msra.mxu0 0
    %93 = vmatpush.bf16.msra.mxu0 0
    %94 = vmatpush.bf16.msra.mxu0 0
    %95 = vmatpush.bf16.msra.mxu0 %v73
    %96 = vmatmul.bf16.gmra.mxu0 %v66
    %v97 = vpop.f32.mrf.mxu0
    %v98 = vadd.f32 %v56, %v97
    %v99 = vpop.f32.mrf.mxu0
    %100 = vdwg.mxu0
    %v101 = vmax.f32 %v85, 0.0
    %v102 = vmax.f32 %v98, 0.0
    %v103 = vpack.c.bf16 %v101, %v101
    %v104 = vpack.c.bf16 %v102, %v102
    %v105 = vld [vmem:[#allocation2] sm:$0xff]
    %v106 = vld [vmem:[#allocation2 + $0x8] sm:$0xff]
    %v107 = vld [vmem:[#allocation2 + $0x10] sm:$0xff]
    %v108 = vld [vmem:[#allocation2 + $0x18] sm:$0xff]
    %v109 = vld [vmem:[#allocation2 + $0x20] sm:$0xff]
    %v110 = vld [vmem:[#allocation2 + $0x28] sm:$0xff]
    %v111 = vld [vmem:[#allocation2 + $0x30] sm:$0xff]
    %v112 = vld [vmem:[#allocation2 + $0x38] sm:$0xff]
    %v113 = vld [vmem:[#allocation2 + $0x40] sm:$0xff]
    %v114 = vld [vmem:[#allocation2 + $0x48] sm:$0xff]
    %v115 = vld [vmem:[#allocation2 + $0x50] sm:$0xff]
    %v116 = vld [vmem:[#allocation2 + $0x58] sm:$0xff]
    %v117 = vld [vmem:[#allocation2 + $0x60] sm:$0xff]
    %v118 = vld [vmem:[#allocation2 + $0x68] sm:$0xff]
    %v119 = vld [vmem:[#allocation2 + $0x70] sm:$0xff]
    %v120 = vld [vmem:[#allocation2 + $0x78] sm:$0xff]
    %v121 = vld [vmem:[#allocation2 + $0x80] sm:$0xff]
    %v122 = vld [vmem:[#allocation2 + $0x88] sm:$0xff]
    %v123 = vld [vmem:[#allocation2 + $0x90] sm:$0xff]
    %v124 = vld [vmem:[#allocation2 + $0x98] sm:$0xff]
    %v125 = vld [vmem:[#allocation2 + $0xa0] sm:$0xff]
    %v126 = vld [vmem:[#allocation2 + $0xa8] sm:$0xff]
    %v127 = vld [vmem:[#allocation2 + $0xb0] sm:$0xff]
    %v128 = vld [vmem:[#allocation2 + $0xb8] sm:$0xff]
    %v129 = vld [vmem:[#allocation2 + $0xc0] sm:$0xff]
    %v130 = vld [vmem:[#allocation2 + $0xc8] sm:$0xff]
    %v131 = vld [vmem:[#allocation2 + $0xd0] sm:$0xff]
    %v132 = vld [vmem:[#allocation2 + $0xd8] sm:$0xff]
    %v133 = vld [vmem:[#allocation2 + $0xe0] sm:$0xff]
    %v134 = vld [vmem:[#allocation2 + $0xe8] sm:$0xff]
    %v135 = vld [vmem:[#allocation2 + $0xf0] sm:$0xff]
    %v136 = vld [vmem:[#allocation2 + $0xf8] sm:$0xff]
    %v137 = vld [vmem:[%s4] sm:$0x3]
    %v139 = vperm.slane %v137, 0
    %v140 = vperm.slane %v137, 1
    %v175 = vunpack.c.l.b16 %v105
    %v176 = vunpack.c.h.b16 %v105
    %v177 = vunpack.c.l.b16 %v106
    %v178 = vunpack.c.h.b16 %v106
    %v179 = vunpack.c.l.b16 %v107
    %v180 = vunpack.c.h.b16 %v107
    %v181 = vunpack.c.l.b16 %v108
    %v182 = vunpack.c.h.b16 %v108
    %v183 = vunpack.c.l.b16 %v109
    %v184 = vunpack.c.h.b16 %v109
    %v185 = vunpack.c.l.b16 %v110
    %v186 = vunpack.c.h.b16 %v110
    %v187 = vunpack.c.l.b16 %v111
    %v188 = vunpack.c.h.b16 %v111
    %v189 = vunpack.c.l.b16 %v112
    %v190 = vunpack.c.h.b16 %v112
    %v191 = vunpack.c.l.b16 %v113
    %v192 = vunpack.c.h.b16 %v113
    %v193 = vunpack.c.l.b16 %v114
    %v194 = vunpack.c.h.b16 %v114
    %v195 = vunpack.c.l.b16 %v115
    %v196 = vunpack.c.h.b16 %v115
    %v197 = vunpack.c.l.b16 %v116
    %v198 = vunpack.c.h.b16 %v116
    %v199 = vunpack.c.l.b16 %v117
    %v200 = vunpack.c.h.b16 %v117
    %v201 = vunpack.c.l.b16 %v118
    %v202 = vunpack.c.h.b16 %v118
    %v203 = vunpack.c.l.b16 %v119
    %v204 = vunpack.c.h.b16 %v119
    %v205 = vunpack.c.l.b16 %v120
    %v206 = vunpack.c.h.b16 %v120
    %v207 = vunpack.c.l.b16 %v121
    %v208 = vunpack.c.h.b16 %v121
    %v209 = vunpack.c.l.b16 %v122
    %v210 = vunpack.c.h.b16 %v122
    %v211 = vunpack.c.l.b16 %v123
    %v212 = vunpack.c.h.b16 %v123
    %v213 = vunpack.c.l.b16 %v124
    %v214 = vunpack.c.h.b16 %v124
    %v215 = vunpack.c.l.b16 %v125
    %v216 = vunpack.c.h.b16 %v125
    %v217 = vunpack.c.l.b16 %v126
    %v218 = vunpack.c.h.b16 %v126
    %v219 = vunpack.c.l.b16 %v127
    %v220 = vunpack.c.h.b16 %v127
    %v221 = vunpack.c.l.b16 %v128
    %v222 = vunpack.c.h.b16 %v128
    %v223 = vunpack.c.l.b16 %v129
    %v224 = vunpack.c.h.b16 %v129
    %v225 = vunpack.c.l.b16 %v130
    %v226 = vunpack.c.h.b16 %v130
    %v227 = vunpack.c.l.b16 %v131
    %v228 = vunpack.c.h.b16 %v131
    %v229 = vunpack.c.l.b16 %v132
    %v230 = vunpack.c.h.b16 %v132
    %v231 = vunpack.c.l.b16 %v133
    %v232 = vunpack.c.h.b16 %v133
    %v233 = vunpack.c.l.b16 %v134
    %v234 = vunpack.c.h.b16 %v134
    %v235 = vunpack.c.l.b16 %v135
    %v236 = vunpack.c.h.b16 %v135
    %v237 = vunpack.c.l.b16 %v136
    %v238 = vunpack.c.h.b16 %v136
    %v239 = vpack.c.b16 %v177, %v175
    %v240 = vpack.c.b16 %v178, %v176
    %v241 = vpack.c.b16 %v181, %v179
    %v242 = vpack.c.b16 %v182, %v180
    %v243 = vpack.c.b16 %v185, %v183
    %v244 = vpack.c.b16 %v186, %v184
    %v245 = vpack.c.b16 %v189, %v187
    %v246 = vpack.c.b16 %v190, %v188
    %v247 = vpack.c.b16 %v193, %v191
    %v248 = vpack.c.b16 %v194, %v192
    %v249 = vpack.c.b16 %v197, %v195
    %v250 = vpack.c.b16 %v198, %v196
    %v251 = vpack.c.b16 %v201, %v199
    %v252 = vpack.c.b16 %v202, %v200
    %v253 = vpack.c.b16 %v205, %v203
    %v254 = vpack.c.b16 %v206, %v204
    %v255 = vpack.c.b16 %v209, %v207
    %v256 = vpack.c.b16 %v210, %v208
    %v257 = vpack.c.b16 %v213, %v211
    %v258 = vpack.c.b16 %v214, %v212
    %v259 = vpack.c.b16 %v217, %v215
    %v260 = vpack.c.b16 %v218, %v216
    %v261 = vpack.c.b16 %v221, %v219
    %v262 = vpack.c.b16 %v222, %v220
    %v263 = vpack.c.b16 %v225, %v223
    %v264 = vpack.c.b16 %v226, %v224
    %v265 = vpack.c.b16 %v229, %v227
    %v266 = vpack.c.b16 %v230, %v228
    %v267 = vpack.c.b16 %v233, %v231
    %v268 = vpack.c.b16 %v234, %v232
    %v269 = vpack.c.b16 %v237, %v235
    %v270 = vpack.c.b16 %v238, %v236
    %303 = vmatpush.bf16.msra.mxu0 %v253
    %304 = vmatpush.bf16.msra.mxu0 %v251
    %305 = vmatpush.bf16.msra.mxu0 %v249
    %306 = vmatpush.bf16.msra.mxu0 %v247
    %307 = vmatpush.bf16.msra.mxu0 %v245
    %308 = vmatpush.bf16.msra.mxu0 %v243
    %309 = vmatpush.bf16.msra.mxu0 %v241
    %310 = vmatpush.bf16.msra.mxu0 %v239
    %311 = vmatmul.bf16.gmra.mxu0 %v103
    %v312 = vpop.f32.mrf.mxu0
    %v313 = vadd.f32 %v139, %v312
    %v314 = vpop.f32.mrf.mxu0
    %315 = vdwg.mxu0
    %316 = vmatpush.bf16.msra.mxu0 %v269
    %317 = vmatpush.bf16.msra.mxu0 %v267
    %318 = vmatpush.bf16.msra.mxu0 %v265
    %319 = vmatpush.bf16.msra.mxu0 %v263
    %320 = vmatpush.bf16.msra.mxu0 %v261
    %321 = vmatpush.bf16.msra.mxu0 %v259
    %322 = vmatpush.bf16.msra.mxu0 %v257
    %323 = vmatpush.bf16.msra.mxu0 %v255
    %324 = vmatmul.bf16.gmra.mxu0 %v104
    %v325 = vpop.f32.mrf.mxu0
    %v326 = vadd.f32 %v313, %v325
    %v327 = vpop.f32.mrf.mxu0
    %328 = vdwg.mxu0
    %329 = vmatpush.bf16.msra.mxu0 %v254
    %330 = vmatpush.bf16.msra.mxu0 %v252
    %331 = vmatpush.bf16.msra.mxu0 %v250
    %332 = vmatpush.bf16.msra.mxu0 %v248
    %333 = vmatpush.bf16.msra.mxu0 %v246
    %334 = vmatpush.bf16.msra.mxu0 %v244
    %335 = vmatpush.bf16.msra.mxu0 %v242
    %336 = vmatpush.bf16.msra.mxu0 %v240
    %337 = vmatmul.bf16.gmra.mxu0 %v103
    %v338 = vpop.f32.mrf.mxu0
    %v339 = vadd.f32 %v140, %v338
    %v340 = vpop.f32.mrf.mxu0
    %341 = vdwg.mxu0
    %342 = vmatpush.bf16.msra.mxu0 %v270
    %343 = vmatpush.bf16.msra.mxu0 %v268
    %344 = vmatpush.bf16.msra.mxu0 %v266
    %345 = vmatpush.bf16.msra.mxu0 %v264
    %346 = vmatpush.bf16.msra.mxu0 %v262
    %347 = vmatpush.bf16.msra.mxu0 %v260
    %348 = vmatpush.bf16.msra.mxu0 %v258
    %349 = vmatpush.bf16.msra.mxu0 %v256
    %350 = vmatmul.bf16.gmra.mxu0 %v104
    %v351 = vpop.f32.mrf.mxu0
    %v352 = vadd.f32 %v339, %v351
    %v353 = vpop.f32.mrf.mxu0
    %354 = vdwg.mxu0
    %v355 = vmax.f32 %v326, 0.0
    %v356 = vmax.f32 %v352, 0.0
    %v357 = vpack.c.bf16 %v355, %v355
    %v358 = vpack.c.bf16 %v356, %v356
    %v359 = vld [vmem:[%s5] sm:$0xf]
    %v360 = vld [vmem:[%s5 + $0x4] sm:$0xf]
    %v361 = vld [vmem:[%s5 + $0x8] sm:$0xf]
    %v362 = vld [vmem:[%s5 + $0xc] sm:$0xf]
    %v363 = vld [vmem:[%s5 + $0x10] sm:$0xf]
    %v364 = vld [vmem:[%s5 + $0x14] sm:$0xf]
    %v365 = vld [vmem:[%s5 + $0x18] sm:$0xf]
    %v366 = vld [vmem:[%s5 + $0x1c] sm:$0xf]
    %v367 = vld [vmem:[%s5 + $0x20] sm:$0xf]
    %v368 = vld [vmem:[%s5 + $0x24] sm:$0xf]
    %v369 = vld [vmem:[%s5 + $0x28] sm:$0xf]
    %v370 = vld [vmem:[%s5 + $0x2c] sm:$0xf]
    %v371 = vld [vmem:[%s5 + $0x30] sm:$0xf]
    %v372 = vld [vmem:[%s5 + $0x34] sm:$0xf]
    %v373 = vld [vmem:[%s5 + $0x38] sm:$0xf]
    %v374 = vld [vmem:[%s5 + $0x3c] sm:$0xf]
    %v375 = vld [vmem:[%s5 + $0x40] sm:$0xf]
    %v376 = vld [vmem:[%s5 + $0x44] sm:$0xf]
    %v377 = vld [vmem:[%s5 + $0x48] sm:$0xf]
    %v378 = vld [vmem:[%s5 + $0x4c] sm:$0xf]
    %v379 = vld [vmem:[%s5 + $0x50] sm:$0xf]
    %v380 = vld [vmem:[%s5 + $0x54] sm:$0xf]
    %v381 = vld [vmem:[%s5 + $0x58] sm:$0xf]
    %v382 = vld [vmem:[%s5 + $0x5c] sm:$0xf]
    %v383 = vld [vmem:[%s5 + $0x60] sm:$0xf]
    %v384 = vld [vmem:[%s5 + $0x64] sm:$0xf]
    %v385 = vld [vmem:[%s5 + $0x68] sm:$0xf]
    %v386 = vld [vmem:[%s5 + $0x6c] sm:$0xf]
    %v387 = vld [vmem:[%s5 + $0x70] sm:$0xf]
    %v388 = vld [vmem:[%s5 + $0x74] sm:$0xf]
    %v389 = vld [vmem:[%s5 + $0x78] sm:$0xf]
    %v390 = vld [vmem:[%s5 + $0x7c] sm:$0xf]
    %v391 = vld [vmem:[%s6] sm:$0x1]
    %v393 = vperm.slane %v391, 0
    %v427 = vunpack.c.l.b16 %v359
    %v428 = vunpack.c.l.b16 %v360
    %v429 = vunpack.c.l.b16 %v361
    %v430 = vunpack.c.l.b16 %v362
    %v431 = vunpack.c.l.b16 %v363
    %v432 = vunpack.c.l.b16 %v364
    %v433 = vunpack.c.l.b16 %v365
    %v434 = vunpack.c.l.b16 %v366
    %v435 = vunpack.c.l.b16 %v367
    %v436 = vunpack.c.l.b16 %v368
    %v437 = vunpack.c.l.b16 %v369
    %v438 = vunpack.c.l.b16 %v370
    %v439 = vunpack.c.l.b16 %v371
    %v440 = vunpack.c.l.b16 %v372
    %v441 = vunpack.c.l.b16 %v373
    %v442 = vunpack.c.l.b16 %v374
    %v443 = vunpack.c.l.b16 %v375
    %v444 = vunpack.c.l.b16 %v376
    %v445 = vunpack.c.l.b16 %v377
    %v446 = vunpack.c.l.b16 %v378
    %v447 = vunpack.c.l.b16 %v379
    %v448 = vunpack.c.l.b16 %v380
    %v449 = vunpack.c.l.b16 %v381
    %v450 = vunpack.c.l.b16 %v382
    %v451 = vunpack.c.l.b16 %v383
    %v452 = vunpack.c.l.b16 %v384
    %v453 = vunpack.c.l.b16 %v385
    %v454 = vunpack.c.l.b16 %v386
    %v455 = vunpack.c.l.b16 %v387
    %v456 = vunpack.c.l.b16 %v388
    %v457 = vunpack.c.l.b16 %v389
    %v458 = vunpack.c.l.b16 %v390
    %v459 = vpack.c.b16 %v428, %v427
    %v460 = vpack.c.b16 %v430, %v429
    %v461 = vpack.c.b16 %v432, %v431
    %v462 = vpack.c.b16 %v434, %v433
    %v463 = vpack.c.b16 %v436, %v435
    %v464 = vpack.c.b16 %v438, %v437
    %v465 = vpack.c.b16 %v440, %v439
    %v466 = vpack.c.b16 %v442, %v441
    %v467 = vpack.c.b16 %v444, %v443
    %v468 = vpack.c.b16 %v446, %v445
    %v469 = vpack.c.b16 %v448, %v447
    %v470 = vpack.c.b16 %v450, %v449
    %v471 = vpack.c.b16 %v452, %v451
    %v472 = vpack.c.b16 %v454, %v453
    %v473 = vpack.c.b16 %v456, %v455
    %v474 = vpack.c.b16 %v458, %v457
    %491 = vmatpush.bf16.msra.mxu0 %v466
    %492 = vmatpush.bf16.msra.mxu0 %v465
    %493 = vmatpush.bf16.msra.mxu0 %v464
    %494 = vmatpush.bf16.msra.mxu0 %v463
    %495 = vmatpush.bf16.msra.mxu0 %v462
    %496 = vmatpush.bf16.msra.mxu0 %v461
    %497 = vmatpush.bf16.msra.mxu0 %v460
    %498 = vmatpush.bf16.msra.mxu0 %v459
    %499 = vmatmul.bf16.gmra.mxu0 %v357
    %v500 = vpop.f32.mrf.mxu0
    %v501 = vadd.f32 %v393, %v500
    %v502 = vpop.f32.mrf.mxu0
    %503 = vdwg.mxu0
    %504 = vmatpush.bf16.msra.mxu0 %v474
    %505 = vmatpush.bf16.msra.mxu0 %v473
    %506 = vmatpush.bf16.msra.mxu0 %v472
    %507 = vmatpush.bf16.msra.mxu0 %v471
    %508 = vmatpush.bf16.msra.mxu0 %v470
    %509 = vmatpush.bf16.msra.mxu0 %v469
    %510 = vmatpush.bf16.msra.mxu0 %v468
    %511 = vmatpush.bf16.msra.mxu0 %v467
    %512 = vmatmul.bf16.gmra.mxu0 %v358
    %v513 = vpop.f32.mrf.mxu0
    %v514 = vadd.f32 %v501, %v513
    %v515 = vpop.f32.mrf.mxu0
    %516 = vdwg.mxu0
    %v517 = vtanh.pop %v514
    %v518 = vld [vmem:[%s7] sm:$0x1]
    %v520 = vperm.slane %v518, 0
    %v522 = vmul.f32 %v517, %v520
    %v523 = vld [vmem:[%s8] sm:$0x1]
    %v525 = vperm.slane %v523, 0
    %v527 = vadd.f32 %v522, %v525
    %vm528 = vcmask 25600
    %529 = vst.msk [vmem:[#allocation5] sm:$0x3] %vm528, %v527
    // Predicated region
    $region42: #{tpu_custom_call.1} parent=1 // pred_check
      _
    $region43: #{tpu_custom_call.1} parent=1 // pred_check_branch
      %531 = sbr.rel (0) target = $region45
    $region44: #{tpu_custom_call.1} parent=1 // pred_region
      %533 = vsyncadd [#allocation4], 0
      %s535 = sshll.u32 [#allocation5], 4
      %s536 = int_to_ptr.vmem [resolvable:$true] %s535
      %s537 = sshll.u32 %s9, 4
      %s538 = int_to_ptr.hbm [resolvable:$true] %s537
      %540 = dma.vmem_to_hbm [thread:$0]  %s536, 32, %s538, [#allocation4]
    $region45: #{tpu_custom_call.1} parent=1 // pred_fallthru
      _
    // Predicated region
    $region46: #{tpu_custom_call.1} parent=1 // pred_check
      _
    $region47: #{tpu_custom_call.1} parent=1 // pred_check_branch
      %542 = sbr.rel (0) target = $region49
    $region48: #{tpu_custom_call.1} parent=1 // pred_region
      %544 = dma.done [#allocation4], 32
    $region49: #{tpu_custom_call.1} parent=1 // pred_fallthru
      _
    %545 = vsyncpa [#allocation3], 1
    %546 = vsyncpa [#allocation4], 1

</llo_original>
